<compile_context>
chip_gen: v7x
topology: tpu7x:2x2x1
jax: 0.10.0
libtpu: 0.0.40
codegen_flags: <defaults>
</compile_context>

<pallas_src>
import jax
import jax.numpy as jnp
from jax.experimental import pallas as pl
from jax.experimental.pallas import tpu as pltpu

D = 128          # latent / hidden dim (lane aligned)
F = 256          # MLP hidden dim
NEG_INF = -1e30
SCALE = 1.0 / float(D) ** 0.5


# ---------------------------------------------------------------------------
# Fused kernel: decoder layer + masked latent-MSE partial sums.
# Grid: (B // BB,), each step processes BB batch rows.
# ---------------------------------------------------------------------------
def fused_decoder_mse_kernel(x_ref, am_ref, lm_ref, tgt_ref,
                             wqkv_ref, wo_ref, w1_ref, w2_ref,
                             partial_ref):
    # x_ref/tgt_ref: (BB, S, D) f32 ; am_ref/lm_ref: (BB, 1, S) f32 lane-dense
    # weights: bf16 ; partial_ref: (1, 1, D) f32 lane-dense partial sum
    BB, S, Dd = x_ref.shape
    x = x_ref[...].reshape(BB * S, Dd)          # fold batches: token-major

    def rms(v):
        return v * jax.lax.rsqrt(jnp.mean(v * v, axis=-1, keepdims=True) + 1e-6)

    # --- fused QKV projection (one MXU pass, N = 3D) ------------------------
    xn = rms(x)
    qkv = jnp.dot(xn.astype(jnp.bfloat16), wqkv_ref[...],
                  preferred_element_type=jnp.float32)       # (BB*S, 3D) f32
    q = qkv[:, :Dd].reshape(BB, S, Dd)
    k = qkv[:, Dd:2 * Dd].reshape(BB, S, Dd)
    v = qkv[:, 2 * Dd:].reshape(BB, S, Dd)

    # --- causal + padding masked attention (softmax in f32) -----------------
    row = jax.lax.broadcasted_iota(jnp.int32, (1, S, S), 1)
    col = jax.lax.broadcasted_iota(jnp.int32, (1, S, S), 2)
    key_ok = am_ref[...] > 0.5                       # (BB, 1, S)
    allowed = jnp.logical_and(col <= row, key_ok)    # (BB, S, S)

    scores = jnp.einsum('bqd,bkd->bqk',
                        q.astype(jnp.bfloat16), k.astype(jnp.bfloat16),
                        preferred_element_type=jnp.float32)
    scores = jnp.where(allowed, scores * SCALE, NEG_INF)
    # Note: a query row with zero valid keys yields uniform (garbage but
    # finite) attention; those tokens are zeroed by the loss mask below,
    # matching the PyTorch module's semantics.
    scores = scores - jnp.max(scores, axis=-1, keepdims=True)
    p = jnp.exp(scores)
    denom = jnp.sum(p, axis=-1, keepdims=True)
    p = p * pl.reciprocal(denom, approx=True)        # divide on the EUP

    attn = jnp.einsum('bqk,bkd->bqd',
                      p.astype(jnp.bfloat16), v.astype(jnp.bfloat16),
                      preferred_element_type=jnp.float32).reshape(BB * S, Dd)
    x = x + jnp.dot(attn.astype(jnp.bfloat16), wo_ref[...],
                    preferred_element_type=jnp.float32)

    # --- MLP -----------------------------------------------------------------
    h = jax.nn.gelu(jnp.dot(rms(x).astype(jnp.bfloat16), w1_ref[...],
                            preferred_element_type=jnp.float32))
    x = x + jnp.dot(h.astype(jnp.bfloat16), w2_ref[...],
                    preferred_element_type=jnp.float32)

    # --- fused masked-MSE partial (lane-dense (1,1,D) output) ----------------
    # partial[d] = sum_{b,s} loss_mask[b,s] * (pred - tgt)^2[b,s,d]
    # expressed as a tiny batched matvec so the mask never leaves its
    # lane-dense (BB,1,S) layout.
    diff = x.reshape(BB, S, Dd) - tgt_ref[...]
    dsq = diff * diff                                           # f32
    mb = jnp.einsum('bks,bsd->bkd', lm_ref[...], dsq,
                    preferred_element_type=jnp.float32)         # (BB, 1, D)
    partial_ref[...] = jnp.sum(mb, axis=0, keepdims=True)       # (1, 1, D)


# ---------------------------------------------------------------------------
# Wrapper
# ---------------------------------------------------------------------------
def _pick_bb(B, S):
    """Fold batches so BB*S rows fill the MXU M-dim, with BB | B."""
    bb = min(B, max(1, 256 // max(S, 1)))
    while B % bb != 0:
        bb -= 1
    return max(bb, 1)


def text2latent_forward(inputs_embeds, attention_mask, label_mask, params):
    # Mirrors Text2Latent.forward
    src = inputs_embeds[:, :-1, :].astype(jnp.float32)
    tgt = inputs_embeds[:, 1:, :].astype(jnp.float32)
    am = attention_mask[:, :-1]
    lm = label_mask[:, 1:]

    B, S, Dd = src.shape
    BB = _pick_bb(B, S)
    G = B // BB

    am3 = am.reshape(B, 1, S).astype(jnp.float32)   # lane-dense masks
    lm3 = lm.reshape(B, 1, S).astype(jnp.float32)

    # fuse Wq/Wk/Wv; bf16 weights for the MXU (f32 accumulation in-kernel)
    wqkv = jnp.concatenate(
        [params["wq"], params["wk"], params["wv"]], axis=1).astype(jnp.bfloat16)
    wo = params["wo"].astype(jnp.bfloat16)
    w1 = params["w1"].astype(jnp.bfloat16)
    w2 = params["w2"].astype(jnp.bfloat16)

    partials = pl.pallas_call(
        fused_decoder_mse_kernel,
        out_shape=jax.ShapeDtypeStruct((G, 1, Dd), jnp.float32),
        grid_spec=pltpu.PrefetchScalarGridSpec(
            num_scalar_prefetch=0,
            grid=(G,),
            in_specs=[
                pl.BlockSpec((BB, S, Dd), lambda g: (g, 0, 0)),   # src embeds
                pl.BlockSpec((BB, 1, S), lambda g: (g, 0, 0)),    # attn mask
                pl.BlockSpec((BB, 1, S), lambda g: (g, 0, 0)),    # loss mask
                pl.BlockSpec((BB, S, Dd), lambda g: (g, 0, 0)),   # tgt embeds
                pl.BlockSpec((Dd, 3 * Dd), lambda g: (0, 0)),     # Wqkv
                pl.BlockSpec((Dd, Dd), lambda g: (0, 0)),         # Wo
                pl.BlockSpec((Dd, F), lambda g: (0, 0)),          # W1
                pl.BlockSpec((F, Dd), lambda g: (0, 0)),          # W2
            ],
            out_specs=pl.BlockSpec((1, 1, Dd), lambda g: (g, 0, 0)),
        ),
        compiler_params=pltpu.CompilerParams(
            dimension_semantics=("parallel",)),
    )(src, am3, lm3, tgt, wqkv, wo, w1, w2)

    total = jnp.sum(partials)
    cnt = jnp.sum(lm3)
    # guard: all-masked batch would be 0/0 (NaN in torch); clamp denominator.
    return total / jnp.maximum(cnt, 1.0)


# ---------------------------------------------------------------------------
# Pure-JAX reference (mirrors the kernel's bf16-matmul / f32-accum numerics,
# exact softmax division) for the correctness check.
# ---------------------------------------------------------------------------
def _ref_layer(x, mask, wqkv, wo, w1, w2):
    S = x.shape[0]

    def rms(v):
        return v * jax.lax.rsqrt(jnp.mean(v * v, axis=-1, keepdims=True) + 1e-6)

    xn = rms(x)
    qkv = jnp.dot(xn.astype(jnp.bfloat16), wqkv,
                  preferred_element_type=jnp.float32)
    q, k, v = qkv[:, :D], qkv[:, D:2 * D], qkv[:, 2 * D:]

    scores = jnp.dot(q.astype(jnp.bfloat16), k.astype(jnp.bfloat16).T,
                     preferred_element_type=jnp.float32)
    row = jnp.arange(S)[:, None]
    col = jnp.arange(S)[None, :]
    allowed = jnp.logical_and(col <= row, mask[None, :] > 0.5)
    scores = jnp.where(allowed, scores * SCALE, NEG_INF)
    scores = scores - jnp.max(scores, axis=-1, keepdims=True)
    p = jnp.exp(scores)
    p = p / jnp.sum(p, axis=-1, keepdims=True)

    attn = jnp.dot(p.astype(jnp.bfloat16), v.astype(jnp.bfloat16),
                   preferred_element_type=jnp.float32)
    x = x + jnp.dot(attn.astype(jnp.bfloat16), wo,
                    preferred_element_type=jnp.float32)
    h = jax.nn.gelu(jnp.dot(rms(x).astype(jnp.bfloat16), w1,
                            preferred_element_type=jnp.float32))
    x = x + jnp.dot(h.astype(jnp.bfloat16), w2,
                    preferred_element_type=jnp.float32)
    return x


def reference_forward(inputs_embeds, attention_mask, label_mask, params):
    src = inputs_embeds[:, :-1]
    tgt = inputs_embeds[:, 1:]
    am = attention_mask[:, :-1]
    lm = label_mask[:, 1:]
    wqkv = jnp.concatenate(
        [params["wq"], params["wk"], params["wv"]], axis=1).astype(jnp.bfloat16)
    wo = params["wo"].astype(jnp.bfloat16)
    w1 = params["w1"].astype(jnp.bfloat16)
    w2 = params["w2"].astype(jnp.bfloat16)
    h = jax.vmap(lambda x, m: _ref_layer(x, m, wqkv, wo, w1, w2))(src, am)
    per_tok = jnp.sum((h - tgt) ** 2, axis=-1)          # (B, S)
    return jnp.sum(per_tok * lm) / jnp.sum(lm)


def init_params(key):
    ks = jax.random.split(key, 6)
    s = 0.02
    return dict(
        wq=s * jax.random.normal(ks[0], (D, D), jnp.float32),
        wk=s * jax.random.normal(ks[1], (D, D), jnp.float32),
        wv=s * jax.random.normal(ks[2], (D, D), jnp.float32),
        wo=s * jax.random.normal(ks[3], (D, D), jnp.float32),
        w1=s * jax.random.normal(ks[4], (D, F), jnp.float32),
        w2=s * jax.random.normal(ks[5], (F, D), jnp.float32),
    )


if __name__ == "__main__":
    key = jax.random.PRNGKey(0)
    k_emb, k_par = jax.random.split(key)

    B, T = 2, 9   # -> src/tgt seq length S = 8
    inputs_embeds = jax.random.normal(k_emb, (B, T, D), jnp.float32)
    attention_mask = jnp.ones((B, T), jnp.float32).at[1, 7:].set(0.0)
    label_mask = (jnp.zeros((B, T), jnp.float32)
                  .at[:, 3:].set(1.0)
                  .at[1, 7:].set(0.0))
    params = init_params(k_par)

    fwd = jax.jit(text2latent_forward)
    loss = jax.block_until_ready(
        fwd(inputs_embeds, attention_mask, label_mask, params))
    ref = jax.block_until_ready(
        reference_forward(inputs_embeds, attention_mask, label_mask, params))

    # tolerance covers bf16 MXU matmuls + EUP approx-reciprocal softmax divide
    assert abs(float(loss) - float(ref)) <= 5e-3 * max(1.0, abs(float(ref))), \
        (float(loss), float(ref))
    print("KERNEL_OK")
</pallas_src>

<mosaic_0001>
module attributes {stable_mosaic.version = 11 : i64} {
  func.func @fused_decoder_mse_kernel(%arg0: i32, %arg1: memref<2x8x128xf32, #tpu.memory_space<vmem>>, %arg2: memref<2x1x8xf32, #tpu.memory_space<vmem>>, %arg3: memref<2x1x8xf32, #tpu.memory_space<vmem>>, %arg4: memref<2x8x128xf32, #tpu.memory_space<vmem>>, %arg5: memref<128x384xbf16, #tpu.memory_space<vmem>>, %arg6: memref<128x128xbf16, #tpu.memory_space<vmem>>, %arg7: memref<128x256xbf16, #tpu.memory_space<vmem>>, %arg8: memref<256x128xbf16, #tpu.memory_space<vmem>>, %arg9: memref<1x1x128xf32, #tpu.memory_space<vmem>>) attributes {dimension_semantics = [#tpu.dimension_semantics<parallel>], iteration_bounds = array<i64: 1>, scalar_prefetch = 0 : i64, scratch_operands = 0 : i64, tpu.core_type = #tpu.core_type<tc>, window_params = [{transform_indices = @transform_0, window_bounds = array<i64: 2, 8, 128>}, {transform_indices = @transform_1, window_bounds = array<i64: 2, 1, 8>}, {transform_indices = @transform_2, window_bounds = array<i64: 2, 1, 8>}, {transform_indices = @transform_3, window_bounds = array<i64: 2, 8, 128>}, {pipeline_mode = #tpu.pipeline_mode<synchronous>, transform_indices = @transform_4, window_bounds = array<i64: 128, 384>}, {pipeline_mode = #tpu.pipeline_mode<synchronous>, transform_indices = @transform_5, window_bounds = array<i64: 128, 128>}, {pipeline_mode = #tpu.pipeline_mode<synchronous>, transform_indices = @transform_6, window_bounds = array<i64: 128, 256>}, {pipeline_mode = #tpu.pipeline_mode<synchronous>, transform_indices = @transform_7, window_bounds = array<i64: 256, 128>}, {transform_indices = @transform_8, window_bounds = array<i64: 1, 1, 128>}]} {
    %c0 = arith.constant 0 : index
    %c0_0 = arith.constant 0 : index
    %c0_1 = arith.constant 0 : index
    %0 = vector.load %arg1[%c0, %c0_0, %c0_1] : memref<2x8x128xf32, #tpu.memory_space<vmem>>, vector<2x8x128xf32>
    %1 = vector.shape_cast %0 : vector<2x8x128xf32> to vector<16x128xf32>
    %2 = arith.mulf %1, %1 : vector<16x128xf32>
    %cst = arith.constant dense<0.000000e+00> : vector<16xf32>
    %3 = vector.multi_reduction <add>, %2, %cst [1] : vector<16x128xf32> to vector<16xf32>
    %4 = vector.shape_cast %3 : vector<16xf32> to vector<16x1xf32>
    %cst_2 = arith.constant 1.280000e+02 : f32
    %5 = vector.broadcast %cst_2 : f32 to vector<16x1xf32>
    %6 = arith.divf %4, %5 : vector<16x1xf32>
    %cst_3 = arith.constant 9.99999997E-7 : f32
    %7 = vector.broadcast %cst_3 : f32 to vector<16x1xf32>
    %8 = arith.addf %6, %7 : vector<16x1xf32>
    %9 = math.rsqrt %8 : vector<16x1xf32>
    %10 = vector.broadcast %9 : vector<16x1xf32> to vector<16x128xf32>
    %11 = arith.mulf %1, %10 : vector<16x128xf32>
    %12 = arith.truncf %11 : vector<16x128xf32> to vector<16x128xbf16>
    %c0_4 = arith.constant 0 : index
    %c0_5 = arith.constant 0 : index
    %13 = vector.load %arg5[%c0_4, %c0_5] : memref<128x384xbf16, #tpu.memory_space<vmem>>, vector<128x384xbf16>
    %cst_6 = arith.constant dense<0.000000e+00> : vector<16x384xf32>
    %14 = tpu.matmul %12, %13, %cst_6 {dimension_numbers = #tpu.dot_dimension_numbers<[1], [0], [0], [1], [0, 0, 1, 1], [], []>} : vector<16x128xbf16>, vector<128x384xbf16>, vector<16x384xf32> -> vector<16x384xf32>
    %15 = vector.extract_strided_slice %14 {offsets = [0, 0], sizes = [16, 128], strides = [1, 1]} : vector<16x384xf32> to vector<16x128xf32>
    %16 = vector.shape_cast %15 : vector<16x128xf32> to vector<2x8x128xf32>
    %17 = vector.extract_strided_slice %14 {offsets = [0, 128], sizes = [16, 128], strides = [1, 1]} : vector<16x384xf32> to vector<16x128xf32>
    %18 = vector.shape_cast %17 : vector<16x128xf32> to vector<2x8x128xf32>
    %19 = vector.extract_strided_slice %14 {offsets = [0, 256], sizes = [16, 128], strides = [1, 1]} : vector<16x384xf32> to vector<16x128xf32>
    %20 = vector.shape_cast %19 : vector<16x128xf32> to vector<2x8x128xf32>
    %21 = tpu.iota {dimensions = array<i32: 1>} : vector<1x8x8xi32>
    %22 = tpu.iota {dimensions = array<i32: 2>} : vector<1x8x8xi32>
    %c0_7 = arith.constant 0 : index
    %c0_8 = arith.constant 0 : index
    %c0_9 = arith.constant 0 : index
    %23 = vector.load %arg2[%c0_7, %c0_8, %c0_9] : memref<2x1x8xf32, #tpu.memory_space<vmem>>, vector<2x1x8xf32>
    %cst_10 = arith.constant 5.000000e-01 : f32
    %24 = vector.broadcast %cst_10 : f32 to vector<2x1x8xf32>
    %25 = arith.cmpf ogt, %23, %24 : vector<2x1x8xf32>
    %26 = arith.cmpi sle, %22, %21 : vector<1x8x8xi32>
    %27 = vector.broadcast %26 : vector<1x8x8xi1> to vector<2x8x8xi1>
    %28 = vector.broadcast %25 : vector<2x1x8xi1> to vector<2x8x8xi1>
    %29 = arith.andi %27, %28 : vector<2x8x8xi1>
    %30 = arith.truncf %16 : vector<2x8x128xf32> to vector<2x8x128xbf16>
    %31 = arith.truncf %18 : vector<2x8x128xf32> to vector<2x8x128xbf16>
    "tpu.trace_start"() <{level = 10 : i32, message = "bqd,bkd->bqk"}> : () -> ()
    %cst_11 = arith.constant dense<0.000000e+00> : vector<2x8x8xf32>
    %32 = tpu.matmul %30, %31, %cst_11 {dimension_numbers = #tpu.dot_dimension_numbers<[2], [2], [1], [1], [0, 0, 0, 1, 1, 1], [0], [0]>} : vector<2x8x128xbf16>, vector<2x8x128xbf16>, vector<2x8x8xf32> -> vector<2x8x8xf32>
    "tpu.trace_stop"() : () -> ()
    %cst_12 = arith.constant 0.0883883461 : f32
    %33 = vector.broadcast %cst_12 : f32 to vector<2x8x8xf32>
    %34 = arith.mulf %32, %33 : vector<2x8x8xf32>
    %cst_13 = arith.constant -1.000000e+30 : f32
    %35 = vector.broadcast %cst_13 : f32 to vector<2x8x8xf32>
    %36 = arith.select %29, %34, %35 : vector<2x8x8xi1>, vector<2x8x8xf32>
    %cst_14 = arith.constant dense<0xFF800000> : vector<2x8xf32>
    %37 = vector.multi_reduction <maximumf>, %36, %cst_14 [2] : vector<2x8x8xf32> to vector<2x8xf32>
    %38 = vector.shape_cast %37 : vector<2x8xf32> to vector<2x8x1xf32>
    %39 = vector.broadcast %38 : vector<2x8x1xf32> to vector<2x8x8xf32>
    %40 = arith.subf %36, %39 : vector<2x8x8xf32>
    %41 = math.exp %40 : vector<2x8x8xf32>
    %cst_15 = arith.constant dense<0.000000e+00> : vector<2x8xf32>
    %42 = vector.multi_reduction <add>, %41, %cst_15 [2] : vector<2x8x8xf32> to vector<2x8xf32>
    %43 = vector.shape_cast %42 : vector<2x8xf32> to vector<2x8x1xf32>
    %44 = tpu.reciprocal %43 {approx = true} : vector<2x8x1xf32> -> vector<2x8x1xf32>
    %45 = vector.broadcast %44 : vector<2x8x1xf32> to vector<2x8x8xf32>
    %46 = arith.mulf %41, %45 : vector<2x8x8xf32>
    %47 = arith.truncf %46 : vector<2x8x8xf32> to vector<2x8x8xbf16>
    %48 = arith.truncf %20 : vector<2x8x128xf32> to vector<2x8x128xbf16>
    "tpu.trace_start"() <{level = 10 : i32, message = "bqk,bkd->bqd"}> : () -> ()
    %cst_16 = arith.constant dense<0.000000e+00> : vector<2x8x128xf32>
    %49 = tpu.matmul %47, %48, %cst_16 {dimension_numbers = #tpu.dot_dimension_numbers<[2], [1], [1], [2], [0, 0, 0, 1, 1, 2], [0], [0]>} : vector<2x8x8xbf16>, vector<2x8x128xbf16>, vector<2x8x128xf32> -> vector<2x8x128xf32>
    "tpu.trace_stop"() : () -> ()
    %50 = vector.shape_cast %49 : vector<2x8x128xf32> to vector<16x128xf32>
    %51 = arith.truncf %50 : vector<16x128xf32> to vector<16x128xbf16>
    %c0_17 = arith.constant 0 : index
    %c0_18 = arith.constant 0 : index
    %52 = vector.load %arg6[%c0_17, %c0_18] : memref<128x128xbf16, #tpu.memory_space<vmem>>, vector<128x128xbf16>
    %cst_19 = arith.constant dense<0.000000e+00> : vector<16x128xf32>
    %53 = tpu.matmul %51, %52, %cst_19 {dimension_numbers = #tpu.dot_dimension_numbers<[1], [0], [0], [1], [0, 0, 1, 1], [], []>} : vector<16x128xbf16>, vector<128x128xbf16>, vector<16x128xf32> -> vector<16x128xf32>
    %54 = arith.addf %1, %53 : vector<16x128xf32>
    %55 = arith.mulf %54, %54 : vector<16x128xf32>
    %cst_20 = arith.constant dense<0.000000e+00> : vector<16xf32>
    %56 = vector.multi_reduction <add>, %55, %cst_20 [1] : vector<16x128xf32> to vector<16xf32>
    %57 = vector.shape_cast %56 : vector<16xf32> to vector<16x1xf32>
    %cst_21 = arith.constant 1.280000e+02 : f32
    %58 = vector.broadcast %cst_21 : f32 to vector<16x1xf32>
    %59 = arith.divf %57, %58 : vector<16x1xf32>
    %cst_22 = arith.constant 9.99999997E-7 : f32
    %60 = vector.broadcast %cst_22 : f32 to vector<16x1xf32>
    %61 = arith.addf %59, %60 : vector<16x1xf32>
    %62 = math.rsqrt %61 : vector<16x1xf32>
    %63 = vector.broadcast %62 : vector<16x1xf32> to vector<16x128xf32>
    %64 = arith.mulf %54, %63 : vector<16x128xf32>
    %65 = arith.truncf %64 : vector<16x128xf32> to vector<16x128xbf16>
    %c0_23 = arith.constant 0 : index
    %c0_24 = arith.constant 0 : index
    %66 = vector.load %arg7[%c0_23, %c0_24] : memref<128x256xbf16, #tpu.memory_space<vmem>>, vector<128x256xbf16>
    %cst_25 = arith.constant dense<0.000000e+00> : vector<16x256xf32>
    %67 = tpu.matmul %65, %66, %cst_25 {dimension_numbers = #tpu.dot_dimension_numbers<[1], [0], [0], [1], [0, 0, 1, 1], [], []>} : vector<16x128xbf16>, vector<128x256xbf16>, vector<16x256xf32> -> vector<16x256xf32>
    %68 = arith.mulf %67, %67 : vector<16x256xf32>
    %69 = arith.mulf %67, %68 : vector<16x256xf32>
    %cst_26 = arith.constant 4.471500e-02 : f32
    %70 = vector.broadcast %cst_26 : f32 to vector<16x256xf32>
    %71 = arith.mulf %70, %69 : vector<16x256xf32>
    %72 = arith.addf %67, %71 : vector<16x256xf32>
    %cst_27 = arith.constant 0.797884583 : f32
    %73 = vector.broadcast %cst_27 : f32 to vector<16x256xf32>
    %74 = arith.mulf %73, %72 : vector<16x256xf32>
    %75 = math.tanh %74 : vector<16x256xf32>
    %cst_28 = arith.constant 1.000000e+00 : f32
    %76 = vector.broadcast %cst_28 : f32 to vector<16x256xf32>
    %77 = arith.addf %76, %75 : vector<16x256xf32>
    %cst_29 = arith.constant 5.000000e-01 : f32
    %78 = vector.broadcast %cst_29 : f32 to vector<16x256xf32>
    %79 = arith.mulf %78, %77 : vector<16x256xf32>
    %80 = arith.mulf %67, %79 : vector<16x256xf32>
    %81 = arith.truncf %80 : vector<16x256xf32> to vector<16x256xbf16>
    %c0_30 = arith.constant 0 : index
    %c0_31 = arith.constant 0 : index
    %82 = vector.load %arg8[%c0_30, %c0_31] : memref<256x128xbf16, #tpu.memory_space<vmem>>, vector<256x128xbf16>
    %cst_32 = arith.constant dense<0.000000e+00> : vector<16x128xf32>
    %83 = tpu.matmul %81, %82, %cst_32 {dimension_numbers = #tpu.dot_dimension_numbers<[1], [0], [0], [1], [0, 0, 1, 1], [], []>} : vector<16x256xbf16>, vector<256x128xbf16>, vector<16x128xf32> -> vector<16x128xf32>
    %84 = arith.addf %54, %83 : vector<16x128xf32>
    %85 = vector.shape_cast %84 : vector<16x128xf32> to vector<2x8x128xf32>
    %c0_33 = arith.constant 0 : index
    %c0_34 = arith.constant 0 : index
    %c0_35 = arith.constant 0 : index
    %86 = vector.load %arg4[%c0_33, %c0_34, %c0_35] : memref<2x8x128xf32, #tpu.memory_space<vmem>>, vector<2x8x128xf32>
    %87 = arith.subf %85, %86 : vector<2x8x128xf32>
    %88 = arith.mulf %87, %87 : vector<2x8x128xf32>
    %c0_36 = arith.constant 0 : index
    %c0_37 = arith.constant 0 : index
    %c0_38 = arith.constant 0 : index
    %89 = vector.load %arg3[%c0_36, %c0_37, %c0_38] : memref<2x1x8xf32, #tpu.memory_space<vmem>>, vector<2x1x8xf32>
    "tpu.trace_start"() <{level = 10 : i32, message = "bks,bsd->bkd"}> : () -> ()
    %cst_39 = arith.constant dense<0.000000e+00> : vector<2x1x128xf32>
    %90 = tpu.matmul %89, %88, %cst_39 {dimension_numbers = #tpu.dot_dimension_numbers<[2], [1], [1], [2], [0, 0, 0, 1, 1, 2], [0], [0]>} : vector<2x1x8xf32>, vector<2x8x128xf32>, vector<2x1x128xf32> -> vector<2x1x128xf32>
    "tpu.trace_stop"() : () -> ()
    %cst_40 = arith.constant dense<0.000000e+00> : vector<1x128xf32>
    %91 = vector.multi_reduction <add>, %90, %cst_40 [0] : vector<2x1x128xf32> to vector<1x128xf32>
    %92 = vector.shape_cast %91 : vector<1x128xf32> to vector<1x1x128xf32>
    %c0_41 = arith.constant 0 : index
    %c0_42 = arith.constant 0 : index
    %c0_43 = arith.constant 0 : index
    %93 = vector.load %arg9[%c0_41, %c0_42, %c0_43] : memref<1x1x128xf32, #tpu.memory_space<vmem>>, vector<1x1x128xf32>
    tpu.vector_store %arg9[%c0_41, %c0_42, %c0_43], %92 {strides = array<i32>} : memref<1x1x128xf32, #tpu.memory_space<vmem>>, vector<1x1x128xf32>,
    return
  }
  func.func @transform_0(%arg0: i32) -> (i32, i32, i32) {
    %c0_i32 = arith.constant 0 : i32
    %c0_i32_0 = arith.constant 0 : i32
    %c0_i32_1 = arith.constant 0 : i32
    return %arg0, %c0_i32, %c0_i32_0 : i32, i32, i32
  }
  func.func @transform_1(%arg0: i32) -> (i32, i32, i32) {
    %c0_i32 = arith.constant 0 : i32
    %c0_i32_0 = arith.constant 0 : i32
    %c0_i32_1 = arith.constant 0 : i32
    return %arg0, %c0_i32, %c0_i32_0 : i32, i32, i32
  }
  func.func @transform_2(%arg0: i32) -> (i32, i32, i32) {
    %c0_i32 = arith.constant 0 : i32
    %c0_i32_0 = arith.constant 0 : i32
    %c0_i32_1 = arith.constant 0 : i32
    return %arg0, %c0_i32, %c0_i32_0 : i32, i32, i32
  }
  func.func @transform_3(%arg0: i32) -> (i32, i32, i32) {
    %c0_i32 = arith.constant 0 : i32
    %c0_i32_0 = arith.constant 0 : i32
    %c0_i32_1 = arith.constant 0 : i32
    return %arg0, %c0_i32, %c0_i32_0 : i32, i32, i32
  }
  func.func @transform_4(%arg0: i32) -> (i32, i32) {
    %c0_i32 = arith.constant 0 : i32
    %c0_i32_0 = arith.constant 0 : i32
    %c0_i32_1 = arith.constant 0 : i32
    return %c0_i32, %c0_i32_0 : i32, i32
  }
  func.func @transform_5(%arg0: i32) -> (i32, i32) {
    %c0_i32 = arith.constant 0 : i32
    %c0_i32_0 = arith.constant 0 : i32
    %c0_i32_1 = arith.constant 0 : i32
    return %c0_i32, %c0_i32_0 : i32, i32
  }
  func.func @transform_6(%arg0: i32) -> (i32, i32) {
    %c0_i32 = arith.constant 0 : i32
    %c0_i32_0 = arith.constant 0 : i32
    %c0_i32_1 = arith.constant 0 : i32
    return %c0_i32, %c0_i32_0 : i32, i32
  }
  func.func @transform_7(%arg0: i32) -> (i32, i32) {
    %c0_i32 = arith.constant 0 : i32
    %c0_i32_0 = arith.constant 0 : i32
    %c0_i32_1 = arith.constant 0 : i32
    return %c0_i32, %c0_i32_0 : i32, i32
  }
  func.func @transform_8(%arg0: i32) -> (i32, i32, i32) {
    %c0_i32 = arith.constant 0 : i32
    %c0_i32_0 = arith.constant 0 : i32
    %c0_i32_1 = arith.constant 0 : i32
    return %arg0, %c0_i32, %c0_i32_0 : i32, i32, i32
  }
}

</mosaic_0001>

<llo_original>
// kernel: text2latent_forward.1
$region0: #{text2latent_forward.1}
  #allocation0 [shape = 'u32[]', space=smem, size = 0x4, offset = 0x4, fixed_abs, tag = 'smem constant byte address 0x4 - core index']
  #allocation1 [shape = 'u32[144,128]{1,0:T(1,128)}', space=vmem, size = 0x12000, scoped, tag = 'internal scratch']
  %s0 = inlined_call_operand.vmem [shape: f32[2,8,128], index: 0, kind: input, shape index: {}]
  %s1 = inlined_call_operand.vmem [shape: f32[2,1,8], index: 1, kind: input, shape index: {}]
  %s2 = inlined_call_operand.vmem [shape: f32[2,1,8], index: 2, kind: input, shape index: {}]
  %s3 = inlined_call_operand.vmem [shape: f32[2,8,128], index: 3, kind: input, shape index: {}]
  %s4 = inlined_call_operand.vmem [shape: bf16[128,384], index: 4, kind: input, shape index: {}]
  %s5 = inlined_call_operand.vmem [shape: bf16[128,128], index: 5, kind: input, shape index: {}]
  %s6 = inlined_call_operand.vmem [shape: bf16[128,256], index: 6, kind: input, shape index: {}]
  %s7 = inlined_call_operand.vmem [shape: bf16[256,128], index: 7, kind: input, shape index: {}]
  %s8 = inlined_call_operand.vmem [shape: f32[1,1,128], index: 8, kind: output, shape index: {}]
  %s9 = sld [smem:[#allocation0]]
  $region42: #{text2latent_forward.1} parent=0
    _
  %s11 = ssub.s32 1, %s9
  %s12 = scalar_select 0, %s11, %s9
  // Predicated region
  $region2: #{text2latent_forward.1} parent=0 // pred_check
    _
  $region3: #{text2latent_forward.1} parent=0 // pred_check_branch
    %14 = sbr.rel (0) target = $region5
  $region4: #{text2latent_forward.1} parent=0 // pred_region
    _
  $region5: #{text2latent_forward.1} parent=0 // pred_fallthru
    _
  // Predicated region
  $region6: #{text2latent_forward.1} parent=0 // pred_check
    _
  $region7: #{text2latent_forward.1} parent=0 // pred_check_branch
    %16 = sbr.rel (0) target = $region9
  $region8: #{text2latent_forward.1} parent=0 // pred_region
    _
  $region9: #{text2latent_forward.1} parent=0 // pred_fallthru
    _
  // Predicated region
  $region10: #{text2latent_forward.1} parent=0 // pred_check
    _
  $region11: #{text2latent_forward.1} parent=0 // pred_check_branch
    %18 = sbr.rel (0) target = $region13
  $region12: #{text2latent_forward.1} parent=0 // pred_region
    _
  $region13: #{text2latent_forward.1} parent=0 // pred_fallthru
    _
  // Predicated region
  $region14: #{text2latent_forward.1} parent=0 // pred_check
    _
  $region15: #{text2latent_forward.1} parent=0 // pred_check_branch
    %20 = sbr.rel (0) target = $region17
  $region16: #{text2latent_forward.1} parent=0 // pred_region
    _
  $region17: #{text2latent_forward.1} parent=0 // pred_fallthru
    _
  // Predicated region
  $region18: #{text2latent_forward.1} parent=0 // pred_check
    _
  $region19: #{text2latent_forward.1} parent=0 // pred_check_branch
    %22 = sbr.rel (0) target = $region21
  $region20: #{text2latent_forward.1} parent=0 // pred_region
    _
  $region21: #{text2latent_forward.1} parent=0 // pred_fallthru
    _
  // Predicated region
  $region22: #{text2latent_forward.1} parent=0 // pred_check
    _
  $region23: #{text2latent_forward.1} parent=0 // pred_check_branch
    %24 = sbr.rel (0) target = $region25
  $region24: #{text2latent_forward.1} parent=0 // pred_region
    _
  $region25: #{text2latent_forward.1} parent=0 // pred_fallthru
    _
  // Predicated region
  $region26: #{text2latent_forward.1} parent=0 // pred_check
    _
  $region27: #{text2latent_forward.1} parent=0 // pred_check_branch
    %26 = sbr.rel (0) target = $region29
  $region28: #{text2latent_forward.1} parent=0 // pred_region
    _
  $region29: #{text2latent_forward.1} parent=0 // pred_fallthru
    _
  // Predicated region
  $region30: #{text2latent_forward.1} parent=0 // pred_check
    _
  $region31: #{text2latent_forward.1} parent=0 // pred_check_branch
    %28 = sbr.rel (0) target = $region33
  $region32: #{text2latent_forward.1} parent=0 // pred_region
    _
  $region33: #{text2latent_forward.1} parent=0 // pred_fallthru
    _
  %v30 = vld [vmem:[%s0] sm:$0xff]
  %v31 = vld [vmem:[%s0 + $0x8] sm:$0xff]
  %v32 = vmul.f32 %v30, %v30
  %v33 = vmul.f32 %v31, %v31
  %34 = vadd.xlane.f32.xlu0 %v32
  %v35 = vpop.xlane.xlu0 %34
  %36 = vadd.xlane.f32.xlu0 %v33
  %v37 = vpop.xlane.xlu0 %36
  %v38 = vrcp.pop 128.0
  %v39 = vmul.f32 %v35, %v38
  %v40 = vmul.f32 %v37, %v38
  %v41 = vadd.f32 %v39, 1e-06
  %v42 = vadd.f32 %v40, 1e-06
  %v43 = vrsqrt.pop %v41
  %v44 = vrsqrt.pop %v42
  %v45 = vmul.f32 %v30, %v43
  %v46 = vmul.f32 %v31, %v44
  %v47 = vpack.c.bf16 %v46, %v45
  %v48 = vld [vmem:[%s4] sm:$0xff]
  %v49 = vld [vmem:[%s4 + $0x8] sm:$0xf]
  %v50 = vld [vmem:[%s4 + $0xc] sm:$0xff]
  %v51 = vld [vmem:[%s4 + $0x14] sm:$0xf]
  %v52 = vld [vmem:[%s4 + $0x18] sm:$0xff]
  %v53 = vld [vmem:[%s4 + $0x20] sm:$0xf]
  %v54 = vld [vmem:[%s4 + $0x24] sm:$0xff]
  %v55 = vld [vmem:[%s4 + $0x2c] sm:$0xf]
  %v56 = vld [vmem:[%s4 + $0x30] sm:$0xff]
  %v57 = vld [vmem:[%s4 + $0x38] sm:$0xf]
  %v58 = vld [vmem:[%s4 + $0x3c] sm:$0xff]
  %v59 = vld [vmem:[%s4 + $0x44] sm:$0xf]
  %v60 = vld [vmem:[%s4 + $0x48] sm:$0xff]
  %v61 = vld [vmem:[%s4 + $0x50] sm:$0xf]
  %v62 = vld [vmem:[%s4 + $0x54] sm:$0xff]
  %v63 = vld [vmem:[%s4 + $0x5c] sm:$0xf]
  %v64 = vld [vmem:[%s4 + $0x60] sm:$0xff]
  %v65 = vld [vmem:[%s4 + $0x68] sm:$0xf]
  %v66 = vld [vmem:[%s4 + $0x6c] sm:$0xff]
  %v67 = vld [vmem:[%s4 + $0x74] sm:$0xf]
  %v68 = vld [vmem:[%s4 + $0x78] sm:$0xff]
  %v69 = vld [vmem:[%s4 + $0x80] sm:$0xf]
  %v70 = vld [vmem:[%s4 + $0x84] sm:$0xff]
  %v71 = vld [vmem:[%s4 + $0x8c] sm:$0xf]
  %v72 = vld [vmem:[%s4 + $0x90] sm:$0xff]
  %v73 = vld [vmem:[%s4 + $0x98] sm:$0xf]
  %v74 = vld [vmem:[%s4 + $0x9c] sm:$0xff]
  %v75 = vld [vmem:[%s4 + $0xa4] sm:$0xf]
  %v76 = vld [vmem:[%s4 + $0xa8] sm:$0xff]
  %v77 = vld [vmem:[%s4 + $0xb0] sm:$0xf]
  %v78 = vld [vmem:[%s4 + $0xb4] sm:$0xff]
  %v79 = vld [vmem:[%s4 + $0xbc] sm:$0xf]
  %v112 = vunpack.c.l.b16 %v48
  %v113 = vunpack.c.h.b16 %v48
  %v114 = vunpack.c.l.b16 %v49
  %v115 = vunpack.c.l.b16 %v50
  %v116 = vunpack.c.h.b16 %v50
  %v117 = vunpack.c.l.b16 %v51
  %v118 = vunpack.c.l.b16 %v52
  %v119 = vunpack.c.h.b16 %v52
  %v120 = vunpack.c.l.b16 %v53
  %v121 = vunpack.c.l.b16 %v54
  %v122 = vunpack.c.h.b16 %v54
  %v123 = vunpack.c.l.b16 %v55
  %v124 = vunpack.c.l.b16 %v56
  %v125 = vunpack.c.h.b16 %v56
  %v126 = vunpack.c.l.b16 %v57
  %v127 = vunpack.c.l.b16 %v58
  %v128 = vunpack.c.h.b16 %v58
  %v129 = vunpack.c.l.b16 %v59
  %v130 = vunpack.c.l.b16 %v60
  %v131 = vunpack.c.h.b16 %v60
  %v132 = vunpack.c.l.b16 %v61
  %v133 = vunpack.c.l.b16 %v62
  %v134 = vunpack.c.h.b16 %v62
  %v135 = vunpack.c.l.b16 %v63
  %v136 = vunpack.c.l.b16 %v64
  %v137 = vunpack.c.h.b16 %v64
  %v138 = vunpack.c.l.b16 %v65
  %v139 = vunpack.c.l.b16 %v66
  %v140 = vunpack.c.h.b16 %v66
  %v141 = vunpack.c.l.b16 %v67
  %v142 = vunpack.c.l.b16 %v68
  %v143 = vunpack.c.h.b16 %v68
  %v144 = vunpack.c.l.b16 %v69
  %v145 = vunpack.c.l.b16 %v70
  %v146 = vunpack.c.h.b16 %v70
  %v147 = vunpack.c.l.b16 %v71
  %v148 = vunpack.c.l.b16 %v72
  %v149 = vunpack.c.h.b16 %v72
  %v150 = vunpack.c.l.b16 %v73
  %v151 = vunpack.c.l.b16 %v74
  %v152 = vunpack.c.h.b16 %v74
  %v153 = vunpack.c.l.b16 %v75
  %v154 = vunpack.c.l.b16 %v76
  %v155 = vunpack.c.h.b16 %v76
  %v156 = vunpack.c.l.b16 %v77
  %v157 = vunpack.c.l.b16 %v78
  %v158 = vunpack.c.h.b16 %v78
  %v159 = vunpack.c.l.b16 %v79
  %v160 = vpack.c.b16 %v115, %v112
  %v161 = vpack.c.b16 %v116, %v113
  %v162 = vpack.c.b16 %v117, %v114
  %v163 = vpack.c.b16 %v121, %v118
  %v164 = vpack.c.b16 %v122, %v119
  %v165 = vpack.c.b16 %v123, %v120
  %v166 = vpack.c.b16 %v127, %v124
  %v167 = vpack.c.b16 %v128, %v125
  %v168 = vpack.c.b16 %v129, %v126
  %v169 = vpack.c.b16 %v133, %v130
  %v170 = vpack.c.b16 %v134, %v131
  %v171 = vpack.c.b16 %v135, %v132
  %v172 = vpack.c.b16 %v139, %v136
  %v173 = vpack.c.b16 %v140, %v137
  %v174 = vpack.c.b16 %v141, %v138
  %v175 = vpack.c.b16 %v145, %v142
  %v176 = vpack.c.b16 %v146, %v143
  %v177 = vpack.c.b16 %v147, %v144
  %v178 = vpack.c.b16 %v151, %v148
  %v179 = vpack.c.b16 %v152, %v149
  %v180 = vpack.c.b16 %v153, %v150
  %v181 = vpack.c.b16 %v157, %v154
  %v182 = vpack.c.b16 %v158, %v155
  %v183 = vpack.c.b16 %v159, %v156
  %208 = vmatprep.subr.bf16.mxu0 %v161
  %209 = vmatpush1.bf16.msra.mxu0 %v160
  %210 = vmatprep.subr.bf16.mxu0 %v164
  %211 = vmatpush1.bf16.msra.mxu0 %v163
  %212 = vmatprep.subr.bf16.mxu0 %v167
  %213 = vmatpush1.bf16.msra.mxu0 %v166
  %214 = vmatprep.subr.bf16.mxu0 %v170
  %215 = vmatpush1.bf16.msra.mxu0 %v169
  %216 = vmatprep.subr.bf16.mxu0 %v173
  %217 = vmatpush1.bf16.msra.mxu0 %v172
  %218 = vmatprep.subr.bf16.mxu0 %v176
  %219 = vmatpush1.bf16.msra.mxu0 %v175
  %220 = vmatprep.subr.bf16.mxu0 %v179
  %221 = vmatpush1.bf16.msra.mxu0 %v178
  %222 = vmatprep.subr.bf16.mxu0 %v182
  %223 = vmatpush1.bf16.msra.mxu0 %v181
  %224 = vmatprep.subr.bf16.mxu0 0
  %225 = vmatpush1.bf16.msra.mxu0 0
  %226 = vmatprep.subr.bf16.mxu0 0
  %227 = vmatpush1.bf16.msra.mxu0 0
  %228 = vmatprep.subr.bf16.mxu0 0
  %229 = vmatpush1.bf16.msra.mxu0 0
  %230 = vmatprep.subr.bf16.mxu0 0
  %231 = vmatpush1.bf16.msra.mxu0 0
  %232 = vmatprep.subr.bf16.mxu0 0
  %233 = vmatpush1.bf16.msra.mxu0 0
  %234 = vmatprep.subr.bf16.mxu0 0
  %235 = vmatpush1.bf16.msra.mxu0 0
  %236 = vmatprep.subr.bf16.mxu0 0
  %237 = vmatpush1.bf16.msra.mxu0 0
  %238 = vmatprep.subr.bf16.mxu0 0
  %239 = vmatpush1.bf16.msra.mxu0 0
  %240 = vmatprep.mubr.bf16.mxu0 0
  %241 = vmatmul.mubr.bf16.gmra.mrb[0].mxu0 %v47
  %v242 = vpop.f32.mrb[0].mxu0
  %v243 = vadd.f32 0.0, %v242
  %v244 = vpop.f32.mrb[0].mxu0
  %v245 = vadd.f32 0.0, %v244
  %v246 = vpop.f32.mrb[0].mxu0
  %v247 = vadd.f32 0.0, %v246
  %v248 = vpop.f32.mrb[0].mxu0
  %v249 = vadd.f32 0.0, %v248
  %250 = vdwg.mxu0
  %251 = vmatprep.subr.bf16.mxu0 0
  %252 = vmatpush1.bf16.msra.mxu0 %v162
  %253 = vmatprep.subr.bf16.mxu0 0
  %254 = vmatpush1.bf16.msra.mxu0 %v165
  %255 = vmatprep.subr.bf16.mxu0 0
  %256 = vmatpush1.bf16.msra.mxu0 %v168
  %257 = vmatprep.subr.bf16.mxu0 0
  %258 = vmatpush1.bf16.msra.mxu0 %v171
  %259 = vmatprep.subr.bf16.mxu0 0
  %260 = vmatpush1.bf16.msra.mxu0 %v174
  %261 = vmatprep.subr.bf16.mxu0 0
  %262 = vmatpush1.bf16.msra.mxu0 %v177
  %263 = vmatprep.subr.bf16.mxu0 0
  %264 = vmatpush1.bf16.msra.mxu0 %v180
  %265 = vmatprep.subr.bf16.mxu0 0
  %266 = vmatpush1.bf16.msra.mxu0 %v183
  %267 = vmatprep.subr.bf16.mxu0 0
  %268 = vmatpush1.bf16.msra.mxu0 0
  %269 = vmatprep.subr.bf16.mxu0 0
  %270 = vmatpush1.bf16.msra.mxu0 0
  %271 = vmatprep.subr.bf16.mxu0 0
  %272 = vmatpush1.bf16.msra.mxu0 0
  %273 = vmatprep.subr.bf16.mxu0 0
  %274 = vmatpush1.bf16.msra.mxu0 0
  %275 = vmatprep.subr.bf16.mxu0 0
  %276 = vmatpush1.bf16.msra.mxu0 0
  %277 = vmatprep.subr.bf16.mxu0 0
  %278 = vmatpush1.bf16.msra.mxu0 0
  %279 = vmatprep.subr.bf16.mxu0 0
  %280 = vmatpush1.bf16.msra.mxu0 0
  %281 = vmatprep.subr.bf16.mxu0 0
  %282 = vmatpush1.bf16.msra.mxu0 0
  %283 = vmatprep.mubr.bf16.mxu0 0
  %284 = vmatmul.mubr.bf16.gmra.mrb[0].mxu0 %v47
  %v285 = vpop.f32.mrb[0].mxu0
  %v286 = vadd.f32 0.0, %v285
  %v287 = vpop.f32.mrb[0].mxu0
  %v288 = vpop.f32.mrb[0].mxu0
  %v289 = vadd.f32 0.0, %v288
  %v290 = vpop.f32.mrb[0].mxu0
  %291 = vdwg.mxu0
  %v292 = vlaneseq
  %v293 = vshrl.u32 %v292, 7
  %v294 = vlaneseq
  %v295 = vand.u32 %v294, 127
  %v296 = vld [vmem:[%s1] sm:$0x1]
  %v297 = vld [vmem:[%s1 + $0x1] sm:$0x1]
  %vm298 = vcmp.gt.f32.partialorder %v296, 0.5
  %vm299 = vcmp.gt.f32.partialorder %v297, 0.5
  %vm300 = vcmp.le.s32.totalorder %v295, %v293
  %v301 = vsel %vm300, 1, 0
  %vm302 = vcmp.eq.s32.totalorder %v301, 1
  %v303 = vsel %vm298, 1, 0
  %v304 = vsel %vm299, 1, 0
  %v305 = vlaneseq
  %v306 = vshrl.u32 %v305, 7
  %v307 = vsub.s32 0, %v306
  %v308 = vrot.slane %v303, %v307
  %v309 = vlaneseq
  %v310 = vshrl.u32 %v309, 7
  %v311 = vsub.s32 0, %v310
  %v312 = vrot.slane %v304, %v311
  %vm313 = vcmp.eq.s32.totalorder %v308, 1
  %vm314 = vcmp.eq.s32.totalorder %v312, 1
  %vm315 = vmand %vm302, %vm313
  %vm316 = vmand %vm302, %vm314
  %v317 = vpack.c.bf16 %v243, %v243
  %v318 = vpack.c.bf16 %v247, %v247
  %v319 = vpack.c.bf16 %v245, %v245
  %v320 = vpack.c.bf16 %v249, %v249
  %321 = vmatprep.subr.bf16.mxu0 0
  %322 = vmatpush1.bf16.xpose.msra.mxu0 %v319
  %323 = vmatprep.subr.bf16.mxu0 0
  %324 = vmatpush1.bf16.xpose.msra.mxu0 0
  %325 = vmatprep.subr.bf16.mxu0 0
  %326 = vmatpush1.bf16.xpose.msra.mxu0 0
  %327 = vmatprep.subr.bf16.mxu0 0
  %328 = vmatpush1.bf16.xpose.msra.mxu0 0
  %329 = vmatprep.subr.bf16.mxu0 0
  %330 = vmatpush1.bf16.xpose.msra.mxu0 0
  %331 = vmatprep.subr.bf16.mxu0 0
  %332 = vmatpush1.bf16.xpose.msra.mxu0 0
  %333 = vmatprep.subr.bf16.mxu0 0
  %334 = vmatpush1.bf16.xpose.msra.mxu0 0
  %335 = vmatprep.subr.bf16.mxu0 0
  %336 = vmatpush1.bf16.xpose.msra.mxu0 0
  %337 = vmatprep.subr.bf16.mxu0 0
  %338 = vmatpush1.bf16.xpose.msra.mxu0 0
  %339 = vmatprep.subr.bf16.mxu0 0
  %340 = vmatpush1.bf16.xpose.msra.mxu0 0
  %341 = vmatprep.subr.bf16.mxu0 0
  %342 = vmatpush1.bf16.xpose.msra.mxu0 0
  %343 = vmatprep.subr.bf16.mxu0 0
  %344 = vmatpush1.bf16.xpose.msra.mxu0 0
  %345 = vmatprep.subr.bf16.mxu0 0
  %346 = vmatpush1.bf16.xpose.msra.mxu0 0
  %347 = vmatprep.subr.bf16.mxu0 0
  %348 = vmatpush1.bf16.xpose.msra.mxu0 0
  %349 = vmatprep.subr.bf16.mxu0 0
  %350 = vmatpush1.bf16.xpose.msra.mxu0 0
  %351 = vmatprep.subr.bf16.mxu0 0
  %352 = vmatpush1.bf16.xpose.msra.mxu0 0
  %353 = vmatprep.mubr.bf16.mxu0 0
  %354 = vmatmul.mubr.bf16.gmra.mrb[0].mxu0 %v317
  %v355 = vpop.f32.mrb[0].mxu0
  %v356 = vadd.f32 0.0, %v355
  %v357 = vpop.f32.mrb[0].mxu0
  %v358 = vpop.f32.mrb[0].mxu0
  %v359 = vpop.f32.mrb[0].mxu0
  %360 = vdwg.mxu0
  %361 = vmatprep.subr.bf16.mxu0 0
  %362 = vmatpush1.bf16.xpose.msra.mxu0 %v320
  %363 = vmatprep.subr.bf16.mxu0 0
  %364 = vmatpush1.bf16.xpose.msra.mxu0 0
  %365 = vmatprep.subr.bf16.mxu0 0
  %366 = vmatpush1.bf16.xpose.msra.mxu0 0
  %367 = vmatprep.subr.bf16.mxu0 0
  %368 = vmatpush1.bf16.xpose.msra.mxu0 0
  %369 = vmatprep.subr.bf16.mxu0 0
  %370 = vmatpush1.bf16.xpose.msra.mxu0 0
  %371 = vmatprep.subr.bf16.mxu0 0
  %372 = vmatpush1.bf16.xpose.msra.mxu0 0
  %373 = vmatprep.subr.bf16.mxu0 0
  %374 = vmatpush1.bf16.xpose.msra.mxu0 0
  %375 = vmatprep.subr.bf16.mxu0 0
  %376 = vmatpush1.bf16.xpose.msra.mxu0 0
  %377 = vmatprep.subr.bf16.mxu0 0
  %378 = vmatpush1.bf16.xpose.msra.mxu0 0
  %379 = vmatprep.subr.bf16.mxu0 0
  %380 = vmatpush1.bf16.xpose.msra.mxu0 0
  %381 = vmatprep.subr.bf16.mxu0 0
  %382 = vmatpush1.bf16.xpose.msra.mxu0 0
  %383 = vmatprep.subr.bf16.mxu0 0
  %384 = vmatpush1.bf16.xpose.msra.mxu0 0
  %385 = vmatprep.subr.bf16.mxu0 0
  %386 = vmatpush1.bf16.xpose.msra.mxu0 0
  %387 = vmatprep.subr.bf16.mxu0 0
  %388 = vmatpush1.bf16.xpose.msra.mxu0 0
  %389 = vmatprep.subr.bf16.mxu0 0
  %390 = vmatpush1.bf16.xpose.msra.mxu0 0
  %391 = vmatprep.subr.bf16.mxu0 0
  %392 = vmatpush1.bf16.xpose.msra.mxu0 0
  %393 = vmatprep.mubr.bf16.mxu0 0
  %394 = vmatmul.mubr.bf16.gmra.mrb[0].mxu0 %v318
  %v395 = vpop.f32.mrb[0].mxu0
  %v396 = vadd.f32 0.0, %v395
  %v397 = vpop.f32.mrb[0].mxu0
  %v398 = vpop.f32.mrb[0].mxu0
  %v399 = vpop.f32.mrb[0].mxu0
  %400 = vdwg.mxu0
  %v401 = vmul.f32 %v356, 0.088388346
  %v402 = vmul.f32 %v396, 0.088388346
  %v403 = vsel %vm315, %v401, -1e+30
  %v404 = vsel %vm316, %v402, -1e+30
  %vm405 = vcmask 64512
  %v406 = vsel %vm405, %v403, -inf
  %407 = vmax.xlane.f32.xlu0 %v406
  %v408 = vpop.xlane.xlu0 %407
  %v409 = vsel %vm405, %v404, -inf
  %410 = vmax.xlane.f32.xlu0 %v409
  %v411 = vpop.xlane.xlu0 %410
  %v412 = vsub.f32 %v403, %v408
  %v413 = vsub.f32 %v404, %v411
  %v414 = vmul.f32 %v412, 1.442695
  %v415 = vpow.pop %v414
  %v416 = vmul.f32 %v413, 1.442695
  %v417 = vpow.pop %v416
  %v418 = vsel %vm405, %v415, 0.0
  %419 = vadd.xlane.f32.xlu0 %v418
  %v420 = vpop.xlane.xlu0 %419
  %v421 = vsel %vm405, %v417, 0.0
  %422 = vadd.xlane.f32.xlu0 %v421
  %v423 = vpop.xlane.xlu0 %422
  %v424 = vrcp.pop %v420
  %v425 = vrcp.pop %v423
  %v426 = vmul.f32 %v415, %v424
  %v427 = vmul.f32 %v417, %v425
  %v428 = vpack.c.bf16 %v426, %v426
  %v429 = vpack.c.bf16 %v427, %v427
  %v430 = vpack.c.bf16 %v286, %v286
  %v431 = vpack.c.bf16 %v289, %v289
  %v433 = vsel %vm405, %v428, 0
  %vm435 = vcmask 1043456
  %v437 = vsel %vm435, %v430, 0
  %439 = vmatprep.subr.bf16.mxu0 0
  %440 = vmatpush1.bf16.msra.mxu0 %v437
  %441 = vmatprep.subr.bf16.mxu0 0
  %442 = vmatpush1.bf16.msra.mxu0 0
  %443 = vmatprep.subr.bf16.mxu0 0
  %444 = vmatpush1.bf16.msra.mxu0 0
  %445 = vmatprep.subr.bf16.mxu0 0
  %446 = vmatpush1.bf16.msra.mxu0 0
  %447 = vmatprep.subr.bf16.mxu0 0
  %448 = vmatpush1.bf16.msra.mxu0 0
  %449 = vmatprep.subr.bf16.mxu0 0
  %450 = vmatpush1.bf16.msra.mxu0 0
  %451 = vmatprep.subr.bf16.mxu0 0
  %452 = vmatpush1.bf16.msra.mxu0 0
  %453 = vmatprep.subr.bf16.mxu0 0
  %454 = vmatpush1.bf16.msra.mxu0 0
  %455 = vmatprep.subr.bf16.mxu0 0
  %456 = vmatpush1.bf16.msra.mxu0 0
  %457 = vmatprep.subr.bf16.mxu0 0
  %458 = vmatpush1.bf16.msra.mxu0 0
  %459 = vmatprep.subr.bf16.mxu0 0
  %460 = vmatpush1.bf16.msra.mxu0 0
  %461 = vmatprep.subr.bf16.mxu0 0
  %462 = vmatpush1.bf16.msra.mxu0 0
  %463 = vmatprep.subr.bf16.mxu0 0
  %464 = vmatpush1.bf16.msra.mxu0 0
  %465 = vmatprep.subr.bf16.mxu0 0
  %466 = vmatpush1.bf16.msra.mxu0 0
  %467 = vmatprep.subr.bf16.mxu0 0
  %468 = vmatpush1.bf16.msra.mxu0 0
  %469 = vmatprep.subr.bf16.mxu0 0
  %470 = vmatpush1.bf16.msra.mxu0 0
  %471 = vmatprep.mubr.bf16.mxu0 0
  %472 = vmatmul.mubr.bf16.gmra.mrb[0].mxu0 %v433
  %v473 = vpop.f32.mrb[0].mxu0
  %v474 = vadd.f32 0.0, %v473
  %v475 = vpop.f32.mrb[0].mxu0
  %v476 = vpop.f32.mrb[0].mxu0
  %v477 = vpop.f32.mrb[0].mxu0
  %478 = vdwg.mxu0
  %v480 = vsel %vm405, %v429, 0
  %v483 = vsel %vm435, %v431, 0
  %485 = vmatprep.subr.bf16.mxu0 0
  %486 = vmatpush1.bf16.msra.mxu0 %v483
  %487 = vmatprep.subr.bf16.mxu0 0
  %488 = vmatpush1.bf16.msra.mxu0 0
  %489 = vmatprep.subr.bf16.mxu0 0
  %490 = vmatpush1.bf16.msra.mxu0 0
  %491 = vmatprep.subr.bf16.mxu0 0
  %492 = vmatpush1.bf16.msra.mxu0 0
  %493 = vmatprep.subr.bf16.mxu0 0
  %494 = vmatpush1.bf16.msra.mxu0 0
  %495 = vmatprep.subr.bf16.mxu0 0
  %496 = vmatpush1.bf16.msra.mxu0 0
  %497 = vmatprep.subr.bf16.mxu0 0
  %498 = vmatpush1.bf16.msra.mxu0 0
  %499 = vmatprep.subr.bf16.mxu0 0
  %500 = vmatpush1.bf16.msra.mxu0 0
  %501 = vmatprep.subr.bf16.mxu0 0
  %502 = vmatpush1.bf16.msra.mxu0 0
  %503 = vmatprep.subr.bf16.mxu0 0
  %504 = vmatpush1.bf16.msra.mxu0 0
  %505 = vmatprep.subr.bf16.mxu0 0
  %506 = vmatpush1.bf16.msra.mxu0 0
  %507 = vmatprep.subr.bf16.mxu0 0
  %508 = vmatpush1.bf16.msra.mxu0 0
  %509 = vmatprep.subr.bf16.mxu0 0
  %510 = vmatpush1.bf16.msra.mxu0 0
  %511 = vmatprep.subr.bf16.mxu0 0
  %512 = vmatpush1.bf16.msra.mxu0 0
  %513 = vmatprep.subr.bf16.mxu0 0
  %514 = vmatpush1.bf16.msra.mxu0 0
  %515 = vmatprep.subr.bf16.mxu0 0
  %516 = vmatpush1.bf16.msra.mxu0 0
  %517 = vmatprep.mubr.bf16.mxu0 0
  %518 = vmatmul.mubr.bf16.gmra.mrb[0].mxu0 %v480
  %v519 = vpop.f32.mrb[0].mxu0
  %v520 = vadd.f32 0.0, %v519
  %v521 = vpop.f32.mrb[0].mxu0
  %v522 = vpop.f32.mrb[0].mxu0
  %v523 = vpop.f32.mrb[0].mxu0
  %524 = vdwg.mxu0
  %v525 = vpack.c.bf16 %v520, %v474
  %v526 = vld [vmem:[%s5] sm:$0xf]
  %v527 = vld [vmem:[%s5 + $0x4] sm:$0xf]
  %v528 = vld [vmem:[%s5 + $0x8] sm:$0xf]
  %v529 = vld [vmem:[%s5 + $0xc] sm:$0xf]
  %v530 = vld [vmem:[%s5 + $0x10] sm:$0xf]
  %v531 = vld [vmem:[%s5 + $0x14] sm:$0xf]
  %v532 = vld [vmem:[%s5 + $0x18] sm:$0xf]
  %v533 = vld [vmem:[%s5 + $0x1c] sm:$0xf]
  %v534 = vld [vmem:[%s5 + $0x20] sm:$0xf]
  %v535 = vld [vmem:[%s5 + $0x24] sm:$0xf]
  %v536 = vld [vmem:[%s5 + $0x28] sm:$0xf]
  %v537 = vld [vmem:[%s5 + $0x2c] sm:$0xf]
  %v538 = vld [vmem:[%s5 + $0x30] sm:$0xf]
  %v539 = vld [vmem:[%s5 + $0x34] sm:$0xf]
  %v540 = vld [vmem:[%s5 + $0x38] sm:$0xf]
  %v541 = vld [vmem:[%s5 + $0x3c] sm:$0xf]
  %v558 = vunpack.c.l.b16 %v526
  %v559 = vunpack.c.l.b16 %v527
  %v560 = vunpack.c.l.b16 %v528
  %v561 = vunpack.c.l.b16 %v529
  %v562 = vunpack.c.l.b16 %v530
  %v563 = vunpack.c.l.b16 %v531
  %v564 = vunpack.c.l.b16 %v532
  %v565 = vunpack.c.l.b16 %v533
  %v566 = vunpack.c.l.b16 %v534
  %v567 = vunpack.c.l.b16 %v535
  %v568 = vunpack.c.l.b16 %v536
  %v569 = vunpack.c.l.b16 %v537
  %v570 = vunpack.c.l.b16 %v538
  %v571 = vunpack.c.l.b16 %v539
  %v572 = vunpack.c.l.b16 %v540
  %v573 = vunpack.c.l.b16 %v541
  %v574 = vpack.c.b16 %v559, %v558
  %v575 = vpack.c.b16 %v561, %v560
  %v576 = vpack.c.b16 %v563, %v562
  %v577 = vpack.c.b16 %v565, %v564
  %v578 = vpack.c.b16 %v567, %v566
  %v579 = vpack.c.b16 %v569, %v568
  %v580 = vpack.c.b16 %v571, %v570
  %v581 = vpack.c.b16 %v573, %v572
  %590 = vmatprep.subr.bf16.mxu0 0
  %591 = vmatpush1.bf16.msra.mxu0 %v574
  %592 = vmatprep.subr.bf16.mxu0 0
  %593 = vmatpush1.bf16.msra.mxu0 %v575
  %594 = vmatprep.subr.bf16.mxu0 0
  %595 = vmatpush1.bf16.msra.mxu0 %v576
  %596 = vmatprep.subr.bf16.mxu0 0
  %597 = vmatpush1.bf16.msra.mxu0 %v577
  %598 = vmatprep.subr.bf16.mxu0 0
  %599 = vmatpush1.bf16.msra.mxu0 %v578
  %600 = vmatprep.subr.bf16.mxu0 0
  %601 = vmatpush1.bf16.msra.mxu0 %v579
  %602 = vmatprep.subr.bf16.mxu0 0
  %603 = vmatpush1.bf16.msra.mxu0 %v580
  %604 = vmatprep.subr.bf16.mxu0 0
  %605 = vmatpush1.bf16.msra.mxu0 %v581
  %606 = vmatprep.subr.bf16.mxu0 0
  %607 = vmatpush1.bf16.msra.mxu0 0
  %608 = vmatprep.subr.bf16.mxu0 0
  %609 = vmatpush1.bf16.msra.mxu0 0
  %610 = vmatprep.subr.bf16.mxu0 0
  %611 = vmatpush1.bf16.msra.mxu0 0
  %612 = vmatprep.subr.bf16.mxu0 0
  %613 = vmatpush1.bf16.msra.mxu0 0
  %614 = vmatprep.subr.bf16.mxu0 0
  %615 = vmatpush1.bf16.msra.mxu0 0
  %616 = vmatprep.subr.bf16.mxu0 0
  %617 = vmatpush1.bf16.msra.mxu0 0
  %618 = vmatprep.subr.bf16.mxu0 0
  %619 = vmatpush1.bf16.msra.mxu0 0
  %620 = vmatprep.subr.bf16.mxu0 0
  %621 = vmatpush1.bf16.msra.mxu0 0
  %622 = vmatprep.mubr.bf16.mxu0 0
  %623 = vmatmul.mubr.bf16.gmra.mrb[0].mxu0 %v525
  %v624 = vpop.f32.mrb[0].mxu0
  %v625 = vadd.f32 0.0, %v624
  %v626 = vpop.f32.mrb[0].mxu0
  %v627 = vpop.f32.mrb[0].mxu0
  %v628 = vadd.f32 0.0, %v627
  %v629 = vpop.f32.mrb[0].mxu0
  %630 = vdwg.mxu0
  %v631 = vadd.f32 %v30, %v625
  %v632 = vadd.f32 %v31, %v628
  %v633 = vmul.f32 %v631, %v631
  %v634 = vmul.f32 %v632, %v632
  %635 = vadd.xlane.f32.xlu0 %v633
  %v636 = vpop.xlane.xlu0 %635
  %637 = vadd.xlane.f32.xlu0 %v634
  %v638 = vpop.xlane.xlu0 %637
  %v639 = vmul.f32 %v636, %v38
  %v640 = vmul.f32 %v638, %v38
  %v641 = vadd.f32 %v639, 1e-06
  %v642 = vadd.f32 %v640, 1e-06
  %v643 = vrsqrt.pop %v641
  %v644 = vrsqrt.pop %v642
  %v645 = vmul.f32 %v631, %v643
  %v646 = vmul.f32 %v632, %v644
  %v647 = vpack.c.bf16 %v646, %v645
  %v648 = vld [vmem:[%s6] sm:$0xff]
  %v649 = vld [vmem:[%s6 + $0x8] sm:$0xff]
  %v650 = vld [vmem:[%s6 + $0x10] sm:$0xff]
  %v651 = vld [vmem:[%s6 + $0x18] sm:$0xff]
  %v652 = vld [vmem:[%s6 + $0x20] sm:$0xff]
  %v653 = vld [vmem:[%s6 + $0x28] sm:$0xff]
  %v654 = vld [vmem:[%s6 + $0x30] sm:$0xff]
  %v655 = vld [vmem:[%s6 + $0x38] sm:$0xff]
  %v656 = vld [vmem:[%s6 + $0x40] sm:$0xff]
  %v657 = vld [vmem:[%s6 + $0x48] sm:$0xff]
  %v658 = vld [vmem:[%s6 + $0x50] sm:$0xff]
  %v659 = vld [vmem:[%s6 + $0x58] sm:$0xff]
  %v660 = vld [vmem:[%s6 + $0x60] sm:$0xff]
  %v661 = vld [vmem:[%s6 + $0x68] sm:$0xff]
  %v662 = vld [vmem:[%s6 + $0x70] sm:$0xff]
  %v663 = vld [vmem:[%s6 + $0x78] sm:$0xff]
  %v680 = vunpack.c.l.b16 %v648
  %v681 = vunpack.c.h.b16 %v648
  %v682 = vunpack.c.l.b16 %v649
  %v683 = vunpack.c.h.b16 %v649
  %v684 = vunpack.c.l.b16 %v650
  %v685 = vunpack.c.h.b16 %v650
  %v686 = vunpack.c.l.b16 %v651
  %v687 = vunpack.c.h.b16 %v651
  %v688 = vunpack.c.l.b16 %v652
  %v689 = vunpack.c.h.b16 %v652
  %v690 = vunpack.c.l.b16 %v653
  %v691 = vunpack.c.h.b16 %v653
  %v692 = vunpack.c.l.b16 %v654
  %v693 = vunpack.c.h.b16 %v654
  %v694 = vunpack.c.l.b16 %v655
  %v695 = vunpack.c.h.b16 %v655
  %v696 = vunpack.c.l.b16 %v656
  %v697 = vunpack.c.h.b16 %v656
  %v698 = vunpack.c.l.b16 %v657
  %v699 = vunpack.c.h.b16 %v657
  %v700 = vunpack.c.l.b16 %v658
  %v701 = vunpack.c.h.b16 %v658
  %v702 = vunpack.c.l.b16 %v659
  %v703 = vunpack.c.h.b16 %v659
  %v704 = vunpack.c.l.b16 %v660
  %v705 = vunpack.c.h.b16 %v660
  %v706 = vunpack.c.l.b16 %v661
  %v707 = vunpack.c.h.b16 %v661
  %v708 = vunpack.c.l.b16 %v662
  %v709 = vunpack.c.h.b16 %v662
  %v710 = vunpack.c.l.b16 %v663
  %v711 = vunpack.c.h.b16 %v663
  %v712 = vpack.c.b16 %v682, %v680
  %v713 = vpack.c.b16 %v683, %v681
  %v714 = vpack.c.b16 %v686, %v684
  %v715 = vpack.c.b16 %v687, %v685
  %v716 = vpack.c.b16 %v690, %v688
  %v717 = vpack.c.b16 %v691, %v689
  %v718 = vpack.c.b16 %v694, %v692
  %v719 = vpack.c.b16 %v695, %v693
  %v720 = vpack.c.b16 %v698, %v696
  %v721 = vpack.c.b16 %v699, %v697
  %v722 = vpack.c.b16 %v702, %v700
  %v723 = vpack.c.b16 %v703, %v701
  %v724 = vpack.c.b16 %v706, %v704
  %v725 = vpack.c.b16 %v707, %v705
  %v726 = vpack.c.b16 %v710, %v708
  %v727 = vpack.c.b16 %v711, %v709
  %744 = vmatprep.subr.bf16.mxu0 %v713
  %745 = vmatpush1.bf16.msra.mxu0 %v712
  %746 = vmatprep.subr.bf16.mxu0 %v715
  %747 = vmatpush1.bf16.msra.mxu0 %v714
  %748 = vmatprep.subr.bf16.mxu0 %v717
  %749 = vmatpush1.bf16.msra.mxu0 %v716
  %750 = vmatprep.subr.bf16.mxu0 %v719
  %751 = vmatpush1.bf16.msra.mxu0 %v718
  %752 = vmatprep.subr.bf16.mxu0 %v721
  %753 = vmatpush1.bf16.msra.mxu0 %v720
  %754 = vmatprep.subr.bf16.mxu0 %v723
  %755 = vmatpush1.bf16.msra.mxu0 %v722
  %756 = vmatprep.subr.bf16.mxu0 %v725
  %757 = vmatpush1.bf16.msra.mxu0 %v724
  %758 = vmatprep.subr.bf16.mxu0 %v727
  %759 = vmatpush1.bf16.msra.mxu0 %v726
  %760 = vmatprep.subr.bf16.mxu0 0
  %761 = vmatpush1.bf16.msra.mxu0 0
  %762 = vmatprep.subr.bf16.mxu0 0
  %763 = vmatpush1.bf16.msra.mxu0 0
  %764 = vmatprep.subr.bf16.mxu0 0
  %765 = vmatpush1.bf16.msra.mxu0 0
  %766 = vmatprep.subr.bf16.mxu0 0
  %767 = vmatpush1.bf16.msra.mxu0 0
  %768 = vmatprep.subr.bf16.mxu0 0
  %769 = vmatpush1.bf16.msra.mxu0 0
  %770 = vmatprep.subr.bf16.mxu0 0
  %771 = vmatpush1.bf16.msra.mxu0 0
  %772 = vmatprep.subr.bf16.mxu0 0
  %773 = vmatpush1.bf16.msra.mxu0 0
  %774 = vmatprep.subr.bf16.mxu0 0
  %775 = vmatpush1.bf16.msra.mxu0 0
  %776 = vmatprep.mubr.bf16.mxu0 0
  %777 = vmatmul.mubr.bf16.gmra.mrb[0].mxu0 %v647
  %v778 = vpop.f32.mrb[0].mxu0
  %v779 = vadd.f32 0.0, %v778
  %v780 = vpop.f32.mrb[0].mxu0
  %v781 = vadd.f32 0.0, %v780
  %v782 = vpop.f32.mrb[0].mxu0
  %v783 = vadd.f32 0.0, %v782
  %v784 = vpop.f32.mrb[0].mxu0
  %v785 = vadd.f32 0.0, %v784
  %786 = vdwg.mxu0
  %v787 = vmul.f32 %v779, %v779
  %v788 = vmul.f32 %v781, %v781
  %v789 = vmul.f32 %v783, %v783
  %v790 = vmul.f32 %v785, %v785
  %v791 = vmul.f32 %v779, %v787
  %v792 = vmul.f32 %v781, %v788
  %v793 = vmul.f32 %v783, %v789
  %v794 = vmul.f32 %v785, %v790
  %v795 = vmul.f32 %v791, 0.044715
  %v796 = vmul.f32 %v792, 0.044715
  %v797 = vmul.f32 %v793, 0.044715
  %v798 = vmul.f32 %v794, 0.044715
  %v799 = vadd.f32 %v779, %v795
  %v800 = vadd.f32 %v781, %v796
  %v801 = vadd.f32 %v783, %v797
  %v802 = vadd.f32 %v785, %v798
  %v803 = vmul.f32 %v799, 0.7978846
  %v804 = vmul.f32 %v800, 0.7978846
  %v805 = vmul.f32 %v801, 0.7978846
  %v806 = vmul.f32 %v802, 0.7978846
  %v807 = vtanh.pop %v803
  %v808 = vtanh.pop %v804
  %v809 = vtanh.pop %v805
  %v810 = vtanh.pop %v806
  %v811 = vadd.f32 %v807, 1.0
  %v812 = vadd.f32 %v808, 1.0
  %v813 = vadd.f32 %v809, 1.0
  %v814 = vadd.f32 %v810, 1.0
  %v815 = vmul.f32 %v811, 0.5
  %v816 = vmul.f32 %v812, 0.5
  %v817 = vmul.f32 %v813, 0.5
  %v818 = vmul.f32 %v814, 0.5
  %v819 = vmul.f32 %v779, %v815
  %v820 = vmul.f32 %v781, %v816
  %v821 = vmul.f32 %v783, %v817
  %v822 = vmul.f32 %v785, %v818
  %v823 = vpack.c.bf16 %v821, %v819
  %v824 = vpack.c.bf16 %v822, %v820
  %v825 = vld [vmem:[%s7] sm:$0xf]
  %v826 = vld [vmem:[%s7 + $0x4] sm:$0xf]
  %v827 = vld [vmem:[%s7 + $0x8] sm:$0xf]
  %v828 = vld [vmem:[%s7 + $0xc] sm:$0xf]
  %v829 = vld [vmem:[%s7 + $0x10] sm:$0xf]
  %v830 = vld [vmem:[%s7 + $0x14] sm:$0xf]
  %v831 = vld [vmem:[%s7 + $0x18] sm:$0xf]
  %v832 = vld [vmem:[%s7 + $0x1c] sm:$0xf]
  %v833 = vld [vmem:[%s7 + $0x20] sm:$0xf]
  %v834 = vld [vmem:[%s7 + $0x24] sm:$0xf]
  %v835 = vld [vmem:[%s7 + $0x28] sm:$0xf]
  %v836 = vld [vmem:[%s7 + $0x2c] sm:$0xf]
  %v837 = vld [vmem:[%s7 + $0x30] sm:$0xf]
  %v838 = vld [vmem:[%s7 + $0x34] sm:$0xf]
  %v839 = vld [vmem:[%s7 + $0x38] sm:$0xf]
  %v840 = vld [vmem:[%s7 + $0x3c] sm:$0xf]
  %v841 = vld [vmem:[%s7 + $0x40] sm:$0xf]
  %v842 = vld [vmem:[%s7 + $0x44] sm:$0xf]
  %v843 = vld [vmem:[%s7 + $0x48] sm:$0xf]
  %v844 = vld [vmem:[%s7 + $0x4c] sm:$0xf]
  %v845 = vld [vmem:[%s7 + $0x50] sm:$0xf]
  %v846 = vld [vmem:[%s7 + $0x54] sm:$0xf]
  %v847 = vld [vmem:[%s7 + $0x58] sm:$0xf]
  %v848 = vld [vmem:[%s7 + $0x5c] sm:$0xf]
  %v849 = vld [vmem:[%s7 + $0x60] sm:$0xf]
  %v850 = vld [vmem:[%s7 + $0x64] sm:$0xf]
  %v851 = vld [vmem:[%s7 + $0x68] sm:$0xf]
  %v852 = vld [vmem:[%s7 + $0x6c] sm:$0xf]
  %v853 = vld [vmem:[%s7 + $0x70] sm:$0xf]
  %v854 = vld [vmem:[%s7 + $0x74] sm:$0xf]
  %v855 = vld [vmem:[%s7 + $0x78] sm:$0xf]
  %v856 = vld [vmem:[%s7 + $0x7c] sm:$0xf]
  %v889 = vunpack.c.l.b16 %v825
  %v890 = vunpack.c.l.b16 %v826
  %v891 = vunpack.c.l.b16 %v827
  %v892 = vunpack.c.l.b16 %v828
  %v893 = vunpack.c.l.b16 %v829
  %v894 = vunpack.c.l.b16 %v830
  %v895 = vunpack.c.l.b16 %v831
  %v896 = vunpack.c.l.b16 %v832
  %v897 = vunpack.c.l.b16 %v833
  %v898 = vunpack.c.l.b16 %v834
  %v899 = vunpack.c.l.b16 %v835
  %v900 = vunpack.c.l.b16 %v836
  %v901 = vunpack.c.l.b16 %v837
  %v902 = vunpack.c.l.b16 %v838
  %v903 = vunpack.c.l.b16 %v839
  %v904 = vunpack.c.l.b16 %v840
  %v905 = vunpack.c.l.b16 %v841
  %v906 = vunpack.c.l.b16 %v842
  %v907 = vunpack.c.l.b16 %v843
  %v908 = vunpack.c.l.b16 %v844
  %v909 = vunpack.c.l.b16 %v845
  %v910 = vunpack.c.l.b16 %v846
  %v911 = vunpack.c.l.b16 %v847
  %v912 = vunpack.c.l.b16 %v848
  %v913 = vunpack.c.l.b16 %v849
  %v914 = vunpack.c.l.b16 %v850
  %v915 = vunpack.c.l.b16 %v851
  %v916 = vunpack.c.l.b16 %v852
  %v917 = vunpack.c.l.b16 %v853
  %v918 = vunpack.c.l.b16 %v854
  %v919 = vunpack.c.l.b16 %v855
  %v920 = vunpack.c.l.b16 %v856
  %v921 = vpack.c.b16 %v890, %v889
  %v922 = vpack.c.b16 %v892, %v891
  %v923 = vpack.c.b16 %v894, %v893
  %v924 = vpack.c.b16 %v896, %v895
  %v925 = vpack.c.b16 %v898, %v897
  %v926 = vpack.c.b16 %v900, %v899
  %v927 = vpack.c.b16 %v902, %v901
  %v928 = vpack.c.b16 %v904, %v903
  %v929 = vpack.c.b16 %v906, %v905
  %v930 = vpack.c.b16 %v908, %v907
  %v931 = vpack.c.b16 %v910, %v909
  %v932 = vpack.c.b16 %v912, %v911
  %v933 = vpack.c.b16 %v914, %v913
  %v934 = vpack.c.b16 %v916, %v915
  %v935 = vpack.c.b16 %v918, %v917
  %v936 = vpack.c.b16 %v920, %v919
  %953 = vmatprep.subr.bf16.mxu0 0
  %954 = vmatpush1.bf16.msra.mxu0 %v921
  %955 = vmatprep.subr.bf16.mxu0 0
  %956 = vmatpush1.bf16.msra.mxu0 %v922
  %957 = vmatprep.subr.bf16.mxu0 0
  %958 = vmatpush1.bf16.msra.mxu0 %v923
  %959 = vmatprep.subr.bf16.mxu0 0
  %960 = vmatpush1.bf16.msra.mxu0 %v924
  %961 = vmatprep.subr.bf16.mxu0 0
  %962 = vmatpush1.bf16.msra.mxu0 %v925
  %963 = vmatprep.subr.bf16.mxu0 0
  %964 = vmatpush1.bf16.msra.mxu0 %v926
  %965 = vmatprep.subr.bf16.mxu0 0
  %966 = vmatpush1.bf16.msra.mxu0 %v927
  %967 = vmatprep.subr.bf16.mxu0 0
  %968 = vmatpush1.bf16.msra.mxu0 %v928
  %969 = vmatprep.subr.bf16.mxu0 0
  %970 = vmatpush1.bf16.msra.mxu0 %v929
  %971 = vmatprep.subr.bf16.mxu0 0
  %972 = vmatpush1.bf16.msra.mxu0 %v930
  %973 = vmatprep.subr.bf16.mxu0 0
  %974 = vmatpush1.bf16.msra.mxu0 %v931
  %975 = vmatprep.subr.bf16.mxu0 0
  %976 = vmatpush1.bf16.msra.mxu0 %v932
  %977 = vmatprep.subr.bf16.mxu0 0
  %978 = vmatpush1.bf16.msra.mxu0 %v933
  %979 = vmatprep.subr.bf16.mxu0 0
  %980 = vmatpush1.bf16.msra.mxu0 %v934
  %981 = vmatprep.subr.bf16.mxu0 0
  %982 = vmatpush1.bf16.msra.mxu0 %v935
  %983 = vmatprep.subr.bf16.mxu0 0
  %984 = vmatpush1.bf16.msra.mxu0 %v936
  %985 = vmatprep.mubr.bf16.mxu0 %v824
  %986 = vmatmul.mubr.bf16.gmra.mrb[0].mxu0 %v823
  %v987 = vpop.f32.mrb[0].mxu0
  %v988 = vadd.f32 0.0, %v987
  %v989 = vpop.f32.mrb[0].mxu0
  %v990 = vpop.f32.mrb[0].mxu0
  %v991 = vadd.f32 0.0, %v990
  %v992 = vpop.f32.mrb[0].mxu0
  %993 = vdwg.mxu0
  %v994 = vadd.f32 %v631, %v988
  %v995 = vadd.f32 %v632, %v991
  %v996 = vld [vmem:[%s3] sm:$0xff]
  %v997 = vld [vmem:[%s3 + $0x8] sm:$0xff]
  %v998 = vsub.f32 %v994, %v996
  %v999 = vsub.f32 %v995, %v997
  %v1000 = vmul.f32 %v998, %v998
  %v1001 = vmul.f32 %v999, %v999
  %v1002 = vld [vmem:[%s2] sm:$0x1]
  %v1003 = vld [vmem:[%s2 + $0x1] sm:$0x1]
  %v1005 = vsel %vm405, %v1002, 0
  %1007 = vmatprep.subr.mxu0 0.0
  %1008 = vmatpush1.msra.mxu0 %v1000
  %1009 = vmatprep.subr.mxu0 0.0
  %1010 = vmatpush1.msra.mxu0 0.0
  %1011 = vmatprep.subr.mxu0 0.0
  %1012 = vmatpush1.msra.mxu0 0.0
  %1013 = vmatprep.subr.mxu0 0.0
  %1014 = vmatpush1.msra.mxu0 0.0
  %1015 = vmatprep.subr.mxu0 0.0
  %1016 = vmatpush1.msra.mxu0 0.0
  %1017 = vmatprep.subr.mxu0 0.0
  %1018 = vmatpush1.msra.mxu0 0.0
  %1019 = vmatprep.subr.mxu0 0.0
  %1020 = vmatpush1.msra.mxu0 0.0
  %1021 = vmatprep.subr.mxu0 0.0
  %1022 = vmatpush1.msra.mxu0 0.0
  %1023 = vmatprep.subr.mxu0 0.0
  %1024 = vmatpush1.msra.mxu0 0.0
  %1025 = vmatprep.subr.mxu0 0.0
  %1026 = vmatpush1.msra.mxu0 0.0
  %1027 = vmatprep.subr.mxu0 0.0
  %1028 = vmatpush1.msra.mxu0 0.0
  %1029 = vmatprep.subr.mxu0 0.0
  %1030 = vmatpush1.msra.mxu0 0.0
  %1031 = vmatprep.subr.mxu0 0.0
  %1032 = vmatpush1.msra.mxu0 0.0
  %1033 = vmatprep.subr.mxu0 0.0
  %1034 = vmatpush1.msra.mxu0 0.0
  %1035 = vmatprep.subr.mxu0 0.0
  %1036 = vmatpush1.msra.mxu0 0.0
  %1037 = vmatprep.subr.mxu0 0.0
  %1038 = vmatpush1.msra.mxu0 0.0
  %1039 = vmatprep.subr.mxu0 0.0
  %1040 = vmatpush1.msra.mxu0 0.0
  %1041 = vmatprep.subr.mxu0 0.0
  %1042 = vmatpush1.msra.mxu0 0.0
  %1043 = vmatprep.subr.mxu0 0.0
  %1044 = vmatpush1.msra.mxu0 0.0
  %1045 = vmatprep.subr.mxu0 0.0
  %1046 = vmatpush1.msra.mxu0 0.0
  %1047 = vmatprep.subr.mxu0 0.0
  %1048 = vmatpush1.msra.mxu0 0.0
  %1049 = vmatprep.subr.mxu0 0.0
  %1050 = vmatpush1.msra.mxu0 0.0
  %1051 = vmatprep.subr.mxu0 0.0
  %1052 = vmatpush1.msra.mxu0 0.0
  %1053 = vmatprep.subr.mxu0 0.0
  %1054 = vmatpush1.msra.mxu0 0.0
  %1055 = vmatprep.subr.mxu0 0.0
  %1056 = vmatpush1.msra.mxu0 0.0
  %1057 = vmatprep.subr.mxu0 0.0
  %1058 = vmatpush1.msra.mxu0 0.0
  %1059 = vmatprep.subr.mxu0 0.0
  %1060 = vmatpush1.msra.mxu0 0.0
  %1061 = vmatprep.subr.mxu0 0.0
  %1062 = vmatpush1.msra.mxu0 0.0
  %1063 = vmatprep.subr.mxu0 0.0
  %1064 = vmatpush1.msra.mxu0 0.0
  %1065 = vmatprep.subr.mxu0 0.0
  %1066 = vmatpush1.msra.mxu0 0.0
  %1067 = vmatprep.subr.mxu0 0.0
  %1068 = vmatpush1.msra.mxu0 0.0
  %1069 = vmatprep.subr.mxu0 0.0
  %1070 = vmatpush1.msra.mxu0 0.0
  %1071 = vmatprep.mubr.f32.mxu0 0.0
  %1072 = vmatmul.mubr.f32.gmra.mrb[0].mxu0 %v1005
  %v1073 = vpop.f32.mrb[0].mxu0
  %v1074 = vadd.f32 0.0, %v1073
  %v1075 = vpop.f32.mrb[0].mxu0
  %1076 = vdwg.mxu0
  %v1078 = vsel %vm405, %v1003, 0
  %1080 = vmatprep.subr.mxu0 0.0
  %1081 = vmatpush1.msra.mxu0 %v1001
  %1082 = vmatprep.subr.mxu0 0.0
  %1083 = vmatpush1.msra.mxu0 0.0
  %1084 = vmatprep.subr.mxu0 0.0
  %1085 = vmatpush1.msra.mxu0 0.0
  %1086 = vmatprep.subr.mxu0 0.0
  %1087 = vmatpush1.msra.mxu0 0.0
  %1088 = vmatprep.subr.mxu0 0.0
  %1089 = vmatpush1.msra.mxu0 0.0
  %1090 = vmatprep.subr.mxu0 0.0
  %1091 = vmatpush1.msra.mxu0 0.0
  %1092 = vmatprep.subr.mxu0 0.0
  %1093 = vmatpush1.msra.mxu0 0.0
  %1094 = vmatprep.subr.mxu0 0.0
  %1095 = vmatpush1.msra.mxu0 0.0
  %1096 = vmatprep.subr.mxu0 0.0
  %1097 = vmatpush1.msra.mxu0 0.0
  %1098 = vmatprep.subr.mxu0 0.0
  %1099 = vmatpush1.msra.mxu0 0.0
  %1100 = vmatprep.subr.mxu0 0.0
  %1101 = vmatpush1.msra.mxu0 0.0
  %1102 = vmatprep.subr.mxu0 0.0
  %1103 = vmatpush1.msra.mxu0 0.0
  %1104 = vmatprep.subr.mxu0 0.0
  %1105 = vmatpush1.msra.mxu0 0.0
  %1106 = vmatprep.subr.mxu0 0.0
  %1107 = vmatpush1.msra.mxu0 0.0
  %1108 = vmatprep.subr.mxu0 0.0
  %1109 = vmatpush1.msra.mxu0 0.0
  %1110 = vmatprep.subr.mxu0 0.0
  %1111 = vmatpush1.msra.mxu0 0.0
  %1112 = vmatprep.subr.mxu0 0.0
  %1113 = vmatpush1.msra.mxu0 0.0
  %1114 = vmatprep.subr.mxu0 0.0
  %1115 = vmatpush1.msra.mxu0 0.0
  %1116 = vmatprep.subr.mxu0 0.0
  %1117 = vmatpush1.msra.mxu0 0.0
  %1118 = vmatprep.subr.mxu0 0.0
  %1119 = vmatpush1.msra.mxu0 0.0
  %1120 = vmatprep.subr.mxu0 0.0
  %1121 = vmatpush1.msra.mxu0 0.0
  %1122 = vmatprep.subr.mxu0 0.0
  %1123 = vmatpush1.msra.mxu0 0.0
  %1124 = vmatprep.subr.mxu0 0.0
  %1125 = vmatpush1.msra.mxu0 0.0
  %1126 = vmatprep.subr.mxu0 0.0
  %1127 = vmatpush1.msra.mxu0 0.0
  %1128 = vmatprep.subr.mxu0 0.0
  %1129 = vmatpush1.msra.mxu0 0.0
  %1130 = vmatprep.subr.mxu0 0.0
  %1131 = vmatpush1.msra.mxu0 0.0
  %1132 = vmatprep.subr.mxu0 0.0
  %1133 = vmatpush1.msra.mxu0 0.0
  %1134 = vmatprep.subr.mxu0 0.0
  %1135 = vmatpush1.msra.mxu0 0.0
  %1136 = vmatprep.subr.mxu0 0.0
  %1137 = vmatpush1.msra.mxu0 0.0
  %1138 = vmatprep.subr.mxu0 0.0
  %1139 = vmatpush1.msra.mxu0 0.0
  %1140 = vmatprep.subr.mxu0 0.0
  %1141 = vmatpush1.msra.mxu0 0.0
  %1142 = vmatprep.subr.mxu0 0.0
  %1143 = vmatpush1.msra.mxu0 0.0
  %1144 = vmatprep.mubr.f32.mxu0 0.0
  %1145 = vmatmul.mubr.f32.gmra.mrb[0].mxu0 %v1078
  %v1146 = vpop.f32.mrb[0].mxu0
  %v1147 = vadd.f32 0.0, %v1146
  %v1148 = vpop.f32.mrb[0].mxu0
  %1149 = vdwg.mxu0
  %vm1150 = vcmask 1040384
  %v1151 = vsel %vm1150, %v1074, 0.0
  %v1152 = vsel %vm1150, %v1147, 0.0
  %v1153 = vadd.f32 %v1151, %v1152
  %1154 = vst [vmem:[%s8] sm:$0x1] %v1153
  // Predicated region
  $region34: #{text2latent_forward.1} parent=0 // pred_check
    _
  $region35: #{text2latent_forward.1} parent=0 // pred_check_branch
    %1156 = sbr.rel (0) target = $region37
  $region36: #{text2latent_forward.1} parent=0 // pred_region
    _
  $region37: #{text2latent_forward.1} parent=0 // pred_fallthru
    _
  // Predicated region
  $region38: #{text2latent_forward.1} parent=0 // pred_check
    _
  $region39: #{text2latent_forward.1} parent=0 // pred_check_branch
    %1158 = sbr.rel (0) target = $region41
  $region40: #{text2latent_forward.1} parent=0 // pred_region
    _
  $region41: #{text2latent_forward.1} parent=0 // pred_fallthru
    _

</llo_original>
